<compile_context>
chip_gen: v7x
topology: tpu7x:2x2x1
jax: 0.10.0
libtpu: 0.0.40
codegen_flags: <defaults>
</compile_context>

<pallas_src>
import functools

import jax
import jax.numpy as jnp
from jax.experimental import pallas as pl
from jax.experimental.pallas import tpu as pltpu


OUT_SUBLANES = 8  # pad each example's logits row to a full (8, 128) tile -> unmasked stores


# ----------------------------- fused Pallas kernel ------------------------------


def _fused_forward_kernel(x_ref, wc_ref, bc_ref, wh_ref, bh_ref, o_ref, acc_ref, *, inv_hw):
    """One grid step = one (TILE_S, Kpad) patch tile of one example.

    conv tile = ReLU(x @ Wc + bc) on the MXU, spatial sum folded into acc_ref.
    On the last spatial tile: feats = acc / HW, logits = feats @ Wh + bh -> o_ref.
    """
    s = pl.program_id(1)

    @pl.when(s == 0)
    def _init():
        acc_ref[...] = jnp.zeros_like(acc_ref)

    # (TILE_S, Kpad) bf16 @ (Kpad, Dpad) bf16 -> f32 accumulate on the MXU
    conv = jnp.dot(x_ref[...], wc_ref[...], preferred_element_type=jnp.float32)
    conv = jnp.maximum(conv + bc_ref[...], 0.0)
    # global average pool as a running spatial sum (sublane reduction; XLU slot is idle)
    acc_ref[...] += jnp.sum(conv, axis=0, keepdims=True)

    @pl.when(s == pl.num_programs(1) - 1)
    def _epilogue():
        feats = acc_ref[...] * inv_hw                                  # (1, Dpad) f32
        logits = jnp.dot(feats, wh_ref[...],
                         preferred_element_type=jnp.float32) + bh_ref[...]  # (1, Npad)
        o_ref[...] = jnp.broadcast_to(logits, o_ref.shape).astype(o_ref.dtype)


# ------------------------------ JAX glue / wrapper -------------------------------


def _round_up(x, m):
    return ((x + m - 1) // m) * m


def _pick_spatial_tile(hw):
    for t in (512, 256, 128, 64, 32, 16, 8):
        if hw % t == 0:
            return t
    return hw


def im2col_3x3_same(x_nhwc):
    """3x3, stride 1, SAME padding patches, (kh, kw, cin) ordered. Returns (B, H*W, 9*C)."""
    b, h, w, c = x_nhwc.shape
    xp = jnp.pad(x_nhwc, ((0, 0), (1, 1), (1, 1), (0, 0)))
    cols = [xp[:, i:i + h, j:j + w, :] for i in range(3) for j in range(3)]
    patches = jnp.stack(cols, axis=3)  # (B, H, W, 9, C)
    return patches.reshape(b, h * w, 9 * c)


def init_params(key, c_in, embed_dim, num_classes):
    """Deterministic params in PyTorch layouts (conv: (out,in,kh,kw); linear: (out,in))."""
    k1, k2, k3, k4 = jax.random.split(key, 4)
    return {
        "w_conv": 0.1 * jax.random.normal(k1, (embed_dim, c_in, 3, 3), jnp.float32),
        "b_conv": 0.1 * jax.random.normal(k2, (embed_dim,), jnp.float32),
        "w_head": 0.1 * jax.random.normal(k3, (num_classes, embed_dim), jnp.float32),
        "b_head": 0.1 * jax.random.normal(k4, (num_classes,), jnp.float32),
    }


def prepare_params(params):
    """One-time layout prep: transpose to matmul layouts, pad lanes to 128, cast to bf16."""
    d, c, kh, kw = params["w_conv"].shape
    n = params["w_head"].shape[0]
    k = kh * kw * c
    kpad, dpad, npad = _round_up(k, 128), _round_up(d, 128), _round_up(n, 128)
    # conv weight: (out,in,kh,kw) -> (kh,kw,in,out) -> (9C, D); matches im2col patch order
    w_conv = jnp.transpose(params["w_conv"], (2, 3, 1, 0)).reshape(k, d)
    w_conv = jnp.pad(w_conv, ((0, kpad - k), (0, dpad - d))).astype(jnp.bfloat16)
    b_conv = jnp.pad(params["b_conv"], (0, dpad - d)).reshape(1, dpad).astype(jnp.float32)
    # head: transpose PyTorch (out,in) once here; pad classes to a 128-lane slab
    # (the padded columns are the spare capacity add_classes() would grow into)
    w_head = jnp.pad(params["w_head"].T, ((0, dpad - d), (0, npad - n))).astype(jnp.float32)
    b_head = jnp.pad(params["b_head"], (0, npad - n)).reshape(1, npad).astype(jnp.float32)
    return {"w_conv": w_conv, "b_conv": b_conv, "w_head": w_head, "b_head": b_head}


@functools.partial(jax.jit, static_argnames=("num_classes",))
def expandable_classifier_forward(x_nchw, prep, *, num_classes):
    b, c, h, w = x_nchw.shape
    hw = h * w
    kpad, dpad = prep["w_conv"].shape
    npad = prep["w_head"].shape[1]

    # NCHW -> NHWC, im2col in the wrapper; bf16 halves HBM bytes into the kernel.
    x = jnp.transpose(x_nchw, (0, 2, 3, 1)).astype(jnp.float32)
    patches = im2col_3x3_same(x)                                  # (B, HW, 9C)
    k = patches.shape[-1]
    patches = jnp.pad(patches, ((0, 0), (0, 0), (0, kpad - k))).astype(jnp.bfloat16)

    tile_s = _pick_spatial_tile(hw)
    n_s = hw // tile_s

    flops = 2 * b * hw * kpad * dpad + 2 * b * dpad * npad
    bytes_accessed = int(patches.size * patches.dtype.itemsize
                         + kpad * dpad * 2 + dpad * npad * 4
                         + (dpad + npad) * 4
                         + b * OUT_SUBLANES * npad * 4)

    out = pl.pallas_call(
        functools.partial(_fused_forward_kernel, inv_hw=1.0 / hw),
        out_shape=jax.ShapeDtypeStruct((b * OUT_SUBLANES, npad), jnp.float32),
        grid_spec=pltpu.PrefetchScalarGridSpec(
            num_scalar_prefetch=0,
            grid=(b, n_s),
            in_specs=[
                # patch tile: batch dim squeezed out, spatial rows tiled, lane-dense K
                pl.BlockSpec((None, tile_s, kpad), lambda bi, si: (bi, si, 0)),
                # resident weights / biases
                pl.BlockSpec((kpad, dpad), lambda bi, si: (0, 0)),
                pl.BlockSpec((1, dpad), lambda bi, si: (0, 0)),
                pl.BlockSpec((dpad, npad), lambda bi, si: (0, 0)),
                pl.BlockSpec((1, npad), lambda bi, si: (0, 0)),
            ],
            out_specs=pl.BlockSpec((OUT_SUBLANES, npad), lambda bi, si: (bi, 0)),
            scratch_shapes=[pltpu.VMEM((1, dpad), jnp.float32)],
        ),
        compiler_params=pltpu.CompilerParams(
            dimension_semantics=("parallel", "arbitrary")),
        cost_estimate=pl.CostEstimate(
            flops=flops, transcendentals=0, bytes_accessed=bytes_accessed),
    )(patches, prep["w_conv"], prep["b_conv"], prep["w_head"], prep["b_head"])

    return out.reshape(b, OUT_SUBLANES, npad)[:, 0, :num_classes]


def reference_forward(x_nchw, params):
    """Plain-JAX reference (mirrors the kernel's bf16 MXU inputs, f32 accumulation)."""
    b, c, h, w = x_nchw.shape
    d = params["w_conv"].shape[0]
    x = jnp.transpose(x_nchw, (0, 2, 3, 1)).astype(jnp.float32)
    patches = im2col_3x3_same(x)                                  # (B, HW, 9C)
    w_mat = jnp.transpose(params["w_conv"], (2, 3, 1, 0)).reshape(9 * c, d)
    p = patches.astype(jnp.bfloat16).astype(jnp.float32)
    wm = w_mat.astype(jnp.bfloat16).astype(jnp.float32)
    conv = jnp.maximum(
        jnp.einsum("bsk,kd->bsd", p, wm, precision=jax.lax.Precision.HIGHEST)
        + params["b_conv"], 0.0)
    feats = conv.mean(axis=1)
    return (jnp.dot(feats, params["w_head"].T, precision=jax.lax.Precision.HIGHEST)
            + params["b_head"])


# ---------------------------------- main ------------------------------------

if __name__ == "__main__":
    key = jax.random.PRNGKey(0)
    k_x, k_p = jax.random.split(key)

    B, C, H, W = 2, 4, 16, 16
    EMBED_DIM, NUM_CLASSES = 32, 10

    x = jax.random.normal(k_x, (B, C, H, W), jnp.float32)
    params = init_params(k_p, C, EMBED_DIM, NUM_CLASSES)
    prep = prepare_params(params)

    logits = expandable_classifier_forward(x, prep, num_classes=NUM_CLASSES)
    logits = jax.block_until_ready(logits)

    ref = jax.block_until_ready(reference_forward(x, params))
    assert logits.shape == (B, NUM_CLASSES)
    assert jnp.allclose(logits, ref, rtol=1e-2, atol=1e-2), float(
        jnp.max(jnp.abs(logits - ref)))

    print("KERNEL_OK")
</pallas_src>

<mosaic_0001>
module attributes {stable_mosaic.version = 11 : i64} {
  func.func @_fused_forward_kernel(%arg0: i32, %arg1: i32, %arg2: memref<1x256x128xbf16, #tpu.memory_space<vmem>>, %arg3: memref<128x128xbf16, #tpu.memory_space<vmem>>, %arg4: memref<1x128xf32, #tpu.memory_space<vmem>>, %arg5: memref<128x128xf32, #tpu.memory_space<vmem>>, %arg6: memref<1x128xf32, #tpu.memory_space<vmem>>, %arg7: memref<8x128xf32, #tpu.memory_space<vmem>>, %arg8: memref<1x128xf32, #tpu.memory_space<vmem>>) attributes {dimension_semantics = [#tpu.dimension_semantics<parallel>, #tpu.dimension_semantics<arbitrary>], iteration_bounds = array<i64: 2, 1>, scalar_prefetch = 0 : i64, scratch_operands = 1 : i64, tpu.core_type = #tpu.core_type<tc>, window_params = [{transform_indices = @transform_0, window_bounds = array<i64: 1, 256, 128>}, {pipeline_mode = #tpu.pipeline_mode<synchronous>, transform_indices = @transform_1, window_bounds = array<i64: 128, 128>}, {pipeline_mode = #tpu.pipeline_mode<synchronous>, transform_indices = @transform_2, window_bounds = array<i64: 1, 128>}, {pipeline_mode = #tpu.pipeline_mode<synchronous>, transform_indices = @transform_3, window_bounds = array<i64: 128, 128>}, {pipeline_mode = #tpu.pipeline_mode<synchronous>, transform_indices = @transform_4, window_bounds = array<i64: 1, 128>}, {transform_indices = @transform_5, window_bounds = array<i64: 8, 128>}]} {
    %c0_i32 = arith.constant 0 : i32
    %0 = arith.cmpi eq, %arg1, %c0_i32 : i32
    %1 = arith.extui %0 : i1 to i32
    %c0_i32_0 = arith.constant 0 : i32
    %2 = arith.cmpi ne, %1, %c0_i32_0 : i32
    scf.if %2 {
      %cst_15 = arith.constant 0.000000e+00 : f32
      %20 = vector.broadcast %cst_15 : f32 to vector<1x128xf32>
      %c0_16 = arith.constant 0 : index
      %c0_17 = arith.constant 0 : index
      %21 = vector.load %arg8[%c0_16, %c0_17] : memref<1x128xf32, #tpu.memory_space<vmem>>, vector<1x128xf32>
      tpu.vector_store %arg8[%c0_16, %c0_17], %20 {strides = array<i32>} : memref<1x128xf32, #tpu.memory_space<vmem>>, vector<1x128xf32>,
    } else {
    }
    %c0 = arith.constant 0 : index
    %c0_1 = arith.constant 0 : index
    %c0_2 = arith.constant 0 : index
    %3 = vector.load %arg2[%c0, %c0_1, %c0_2] : memref<1x256x128xbf16, #tpu.memory_space<vmem>>, vector<1x256x128xbf16>
    %4 = vector.shape_cast %3 : vector<1x256x128xbf16> to vector<256x128xbf16>
    %c0_3 = arith.constant 0 : index
    %c0_4 = arith.constant 0 : index
    %5 = vector.load %arg3[%c0_3, %c0_4] : memref<128x128xbf16, #tpu.memory_space<vmem>>, vector<128x128xbf16>
    %cst = arith.constant dense<0.000000e+00> : vector<256x128xf32>
    %6 = tpu.matmul %4, %5, %cst {dimension_numbers = #tpu.dot_dimension_numbers<[1], [0], [0], [1], [0, 0, 1, 1], [], []>} : vector<256x128xbf16>, vector<128x128xbf16>, vector<256x128xf32> -> vector<256x128xf32>
    %c0_5 = arith.constant 0 : index
    %c0_6 = arith.constant 0 : index
    %7 = vector.load %arg4[%c0_5, %c0_6] : memref<1x128xf32, #tpu.memory_space<vmem>>, vector<1x128xf32>
    %8 = vector.broadcast %7 : vector<1x128xf32> to vector<256x128xf32>
    %9 = arith.addf %6, %8 : vector<256x128xf32>
    %cst_7 = arith.constant 0.000000e+00 : f32
    %10 = vector.broadcast %cst_7 : f32 to vector<256x128xf32>
    %11 = arith.maximumf %9, %10 : vector<256x128xf32>
    %c0_8 = arith.constant 0 : index
    %c0_9 = arith.constant 0 : index
    %12 = vector.load %arg8[%c0_8, %c0_9] : memref<1x128xf32, #tpu.memory_space<vmem>>, vector<1x128xf32>
    %cst_10 = arith.constant dense<0.000000e+00> : vector<128xf32>
    %13 = vector.multi_reduction <add>, %11, %cst_10 [0] : vector<256x128xf32> to vector<128xf32>
    %14 = vector.shape_cast %13 : vector<128xf32> to vector<1x128xf32>
    %15 = arith.addf %12, %14 : vector<1x128xf32>
    %c0_11 = arith.constant 0 : index
    %c0_12 = arith.constant 0 : index
    %16 = vector.load %arg8[%c0_11, %c0_12] : memref<1x128xf32, #tpu.memory_space<vmem>>, vector<1x128xf32>
    tpu.vector_store %arg8[%c0_11, %c0_12], %15 {strides = array<i32>} : memref<1x128xf32, #tpu.memory_space<vmem>>, vector<1x128xf32>,
    %c0_i32_13 = arith.constant 0 : i32
    %17 = arith.cmpi eq, %arg1, %c0_i32_13 : i32
    %18 = arith.extui %17 : i1 to i32
    %c0_i32_14 = arith.constant 0 : i32
    %19 = arith.cmpi ne, %18, %c0_i32_14 : i32
    scf.if %19 {
      %c0_15 = arith.constant 0 : index
      %c0_16 = arith.constant 0 : index
      %20 = vector.load %arg8[%c0_15, %c0_16] : memref<1x128xf32, #tpu.memory_space<vmem>>, vector<1x128xf32>
      %cst_17 = arith.constant 3.906250e-03 : f32
      %21 = vector.broadcast %cst_17 : f32 to vector<1x128xf32>
      %22 = arith.mulf %20, %21 : vector<1x128xf32>
      %c0_18 = arith.constant 0 : index
      %c0_19 = arith.constant 0 : index
      %23 = vector.load %arg5[%c0_18, %c0_19] : memref<128x128xf32, #tpu.memory_space<vmem>>, vector<128x128xf32>
      %cst_20 = arith.constant dense<0.000000e+00> : vector<1x128xf32>
      %24 = tpu.matmul %22, %23, %cst_20 {dimension_numbers = #tpu.dot_dimension_numbers<[1], [0], [0], [1], [0, 0, 1, 1], [], []>} : vector<1x128xf32>, vector<128x128xf32>, vector<1x128xf32> -> vector<1x128xf32>
      %c0_21 = arith.constant 0 : index
      %c0_22 = arith.constant 0 : index
      %25 = vector.load %arg6[%c0_21, %c0_22] : memref<1x128xf32, #tpu.memory_space<vmem>>, vector<1x128xf32>
      %26 = arith.addf %24, %25 : vector<1x128xf32>
      %27 = vector.shape_cast %26 : vector<1x128xf32> to vector<1x128xf32>
      %28 = vector.broadcast %27 : vector<1x128xf32> to vector<8x128xf32>
      %c0_23 = arith.constant 0 : index
      %c0_24 = arith.constant 0 : index
      %29 = vector.load %arg7[%c0_23, %c0_24] : memref<8x128xf32, #tpu.memory_space<vmem>>, vector<8x128xf32>
      tpu.vector_store %arg7[%c0_23, %c0_24], %28 {strides = array<i32>} : memref<8x128xf32, #tpu.memory_space<vmem>>, vector<8x128xf32>,
    } else {
    }
    return
  }
  func.func @transform_0(%arg0: i32, %arg1: i32) -> (i32, i32, i32) {
    %c0_i32 = arith.constant 0 : i32
    %c0_i32_0 = arith.constant 0 : i32
    return %arg0, %arg1, %c0_i32 : i32, i32, i32
  }
  func.func @transform_1(%arg0: i32, %arg1: i32) -> (i32, i32) {
    %c0_i32 = arith.constant 0 : i32
    %c0_i32_0 = arith.constant 0 : i32
    %c0_i32_1 = arith.constant 0 : i32
    return %c0_i32, %c0_i32_0 : i32, i32
  }
  func.func @transform_2(%arg0: i32, %arg1: i32) -> (i32, i32) {
    %c0_i32 = arith.constant 0 : i32
    %c0_i32_0 = arith.constant 0 : i32
    %c0_i32_1 = arith.constant 0 : i32
    return %c0_i32, %c0_i32_0 : i32, i32
  }
  func.func @transform_3(%arg0: i32, %arg1: i32) -> (i32, i32) {
    %c0_i32 = arith.constant 0 : i32
    %c0_i32_0 = arith.constant 0 : i32
    %c0_i32_1 = arith.constant 0 : i32
    return %c0_i32, %c0_i32_0 : i32, i32
  }
  func.func @transform_4(%arg0: i32, %arg1: i32) -> (i32, i32) {
    %c0_i32 = arith.constant 0 : i32
    %c0_i32_0 = arith.constant 0 : i32
    %c0_i32_1 = arith.constant 0 : i32
    return %c0_i32, %c0_i32_0 : i32, i32
  }
  func.func @transform_5(%arg0: i32, %arg1: i32) -> (i32, i32) {
    %c0_i32 = arith.constant 0 : i32
    %c0_i32_0 = arith.constant 0 : i32
    return %arg0, %c0_i32 : i32, i32
  }
}

</mosaic_0001>

<llo_original>
// kernel: expandable_classifier_forward.1
$region0: #{expandable_classifier_forward.1}
  #allocation0 [shape = 'u32[]', space=smem, size = 0x4, offset = 0x4, fixed_abs, tag = 'smem constant byte address 0x4 - core index']
  #allocation1 [shape = 'u32[144,128]{1,0:T(1,128)}', space=vmem, size = 0x12000, scoped, tag = 'internal scratch']
  #allocation2 [shape = 'f32[1,128]{1,0:T(1,128)}', space=vmem, size = 0x200, scoped, tag = 'scratch operand']
  %s0 = inlined_call_operand.vmem [shape: bf16[2,256,128], index: 0, kind: input, shape index: {}]
  %s1 = inlined_call_operand.vmem [shape: bf16[128,128], index: 1, kind: input, shape index: {}]
  %s2 = inlined_call_operand.vmem [shape: f32[1,128], index: 2, kind: input, shape index: {}]
  %s3 = inlined_call_operand.vmem [shape: f32[128,128], index: 3, kind: input, shape index: {}]
  %s4 = inlined_call_operand.vmem [shape: f32[1,128], index: 4, kind: input, shape index: {}]
  %s5 = inlined_call_operand.vmem [shape: f32[16,128], index: 5, kind: output, shape index: {}]
  %s6 = sld [smem:[#allocation0]]
  $region61: #{expandable_classifier_forward.1} parent=0
    _
  %s8 = ssub.s32 1, %s6
  %s9 = scalar_select 0, %s8, %s6
  loop: start=0, step=1, limit=4
  $region2: #{expandable_classifier_forward.1} parent=0 // loop_pre_header
    _
  $region3: #{expandable_classifier_forward.1} parent=0 // loop_header
    %s11 = sphi 0, %s15
    %p12 = scmp.ge.s32.totalorder %s11, 4
    %s18 = sphi 0, %s30
    %s19 = sphi 0, %s26
    %s20 = sphi 0, %s18
    %s21 = sphi 0, %s19
    %s22 = sphi 0, %s20
    %s23 = sphi 0, %s21
    %s35 = sphi 0, %s37
    %s38 = sphi 0, %s35
    %s39 = sphi 0, %s38
    %s55 = sphi 0, %s39
    %s59 = sphi 0, %s59
    %s61 = sphi 0, %s59
    %s62 = sphi 0, %s61
    %s76 = sphi 0, %s62
    %s80 = sphi 0, %s80
    %s82 = sphi 0, %s80
    %s83 = sphi 0, %s82
    %s97 = sphi 0, %s83
    %s101 = sphi 0, %s101
    %s103 = sphi 0, %s101
    %s104 = sphi 0, %s103
    %s118 = sphi 0, %s104
    %s122 = sphi 0, %s122
    %s124 = sphi 0, %s122
    %s125 = sphi 0, %s124
    %s139 = sphi 0, %s125
    %s145 = sphi 0, %s147
    %s148 = sphi 0, %s145
    %s149 = sphi 0, %s148
    %s165 = sphi 0, %s149
  $region4: #{expandable_classifier_forward.1} parent=0 // loop_header_branch
    %14 = sbr.rel (%p12) target = $region8
  $region5: #{expandable_classifier_forward.1} parent=0 // loop_body
    %s16 = ssub.s32 %s11, 1
    %s17 = ssub.s32 %s11, 2
    %s24 = sadd.s32 1, %s19
    %p25 = scmp.ge.s32.totalorder %s24, 1
    %s26 = scalar_select %p25, 0, %s24
    %s27 = sadd.s32 1, %s18
    %s28 = scalar_select %p25, %s27, %s18
    %p29 = scmp.ge.s32.totalorder %s28, 2
    %s30 = scalar_select %p29, 0, %s28
    %s31 = ssub.s32 %s18, %s30
    %s32 = ssub.s32 %s19, %s26
    %s33 = sor.u32 %s31, %s32
    %p34 = scmp.eq.s32.totalorder %s33, 0
    %s36 = sadd.s32 %s35, 1
    %s37 = scalar_select %p34, %s35, %s36
    %p40 = pneg %p34
    %p41 = scmp.eq.s32.totalorder %s11, 1
    %p42 = por %p40, %p41
    %p43 = scmp.ne.s32.totalorder %s35, %s38
    %p44 = scmp.eq.s32.totalorder %s11, 0
    %p45 = por %p43, %p44
    %p46 = scmp.ne.s32.totalorder %s35, %s38
    %p47 = scmp.eq.s32.totalorder %s16, 1
    %p48 = por %p46, %p47
    %p49 = scmp.ne.s32.totalorder %s38, %s39
    %p50 = scmp.eq.s32.totalorder %s16, 0
    %p51 = por %p49, %p50
    %p52 = scmp.ne.s32.totalorder %s38, %s39
    %p53 = scmp.eq.s32.totalorder %s17, 1
    %p54 = por %p52, %p53
    %p56 = scmp.ne.s32.totalorder %s39, %s55
    %p57 = scmp.eq.s32.totalorder %s17, 0
    %p58 = por %p56, %p57
    %s60 = sadd.s32 %s59, 1
    %p63 = scmp.eq.s32.totalorder %s11, 1
    %p64 = scmp.ne.s32.totalorder %s59, %s61
    %p65 = scmp.eq.s32.totalorder %s11, 0
    %p66 = por %p64, %p65
    %p67 = scmp.ne.s32.totalorder %s59, %s61
    %p68 = scmp.eq.s32.totalorder %s16, 1
    %p69 = por %p67, %p68
    %p70 = scmp.ne.s32.totalorder %s61, %s62
    %p71 = scmp.eq.s32.totalorder %s16, 0
    %p72 = por %p70, %p71
    %p73 = scmp.ne.s32.totalorder %s61, %s62
    %p74 = scmp.eq.s32.totalorder %s17, 1
    %p75 = por %p73, %p74
    %p77 = scmp.ne.s32.totalorder %s62, %s76
    %p78 = scmp.eq.s32.totalorder %s17, 0
    %p79 = por %p77, %p78
    %s81 = sadd.s32 %s80, 1
    %p84 = scmp.eq.s32.totalorder %s11, 1
    %p85 = scmp.ne.s32.totalorder %s80, %s82
    %p86 = scmp.eq.s32.totalorder %s11, 0
    %p87 = por %p85, %p86
    %p88 = scmp.ne.s32.totalorder %s80, %s82
    %p89 = scmp.eq.s32.totalorder %s16, 1
    %p90 = por %p88, %p89
    %p91 = scmp.ne.s32.totalorder %s82, %s83
    %p92 = scmp.eq.s32.totalorder %s16, 0
    %p93 = por %p91, %p92
    %p94 = scmp.ne.s32.totalorder %s82, %s83
    %p95 = scmp.eq.s32.totalorder %s17, 1
    %p96 = por %p94, %p95
    %p98 = scmp.ne.s32.totalorder %s83, %s97
    %p99 = scmp.eq.s32.totalorder %s17, 0
    %p100 = por %p98, %p99
    %s102 = sadd.s32 %s101, 1
    %p105 = scmp.eq.s32.totalorder %s11, 1
    %p106 = scmp.ne.s32.totalorder %s101, %s103
    %p107 = scmp.eq.s32.totalorder %s11, 0
    %p108 = por %p106, %p107
    %p109 = scmp.ne.s32.totalorder %s101, %s103
    %p110 = scmp.eq.s32.totalorder %s16, 1
    %p111 = por %p109, %p110
    %p112 = scmp.ne.s32.totalorder %s103, %s104
    %p113 = scmp.eq.s32.totalorder %s16, 0
    %p114 = por %p112, %p113
    %p115 = scmp.ne.s32.totalorder %s103, %s104
    %p116 = scmp.eq.s32.totalorder %s17, 1
    %p117 = por %p115, %p116
    %p119 = scmp.ne.s32.totalorder %s104, %s118
    %p120 = scmp.eq.s32.totalorder %s17, 0
    %p121 = por %p119, %p120
    %s123 = sadd.s32 %s122, 1
    %p126 = scmp.eq.s32.totalorder %s11, 1
    %p127 = scmp.ne.s32.totalorder %s122, %s124
    %p128 = scmp.eq.s32.totalorder %s11, 0
    %p129 = por %p127, %p128
    %p130 = scmp.ne.s32.totalorder %s122, %s124
    %p131 = scmp.eq.s32.totalorder %s16, 1
    %p132 = por %p130, %p131
    %p133 = scmp.ne.s32.totalorder %s124, %s125
    %p134 = scmp.eq.s32.totalorder %s16, 0
    %p135 = por %p133, %p134
    %p136 = scmp.ne.s32.totalorder %s124, %s125
    %p137 = scmp.eq.s32.totalorder %s17, 1
    %p138 = por %p136, %p137
    %p140 = scmp.ne.s32.totalorder %s125, %s139
    %p141 = scmp.eq.s32.totalorder %s17, 0
    %p142 = por %p140, %p141
    %s143 = ssub.s32 %s18, %s30
    %p144 = scmp.eq.s32.totalorder %s143, 0
    %s146 = sadd.s32 %s145, 1
    %s147 = scalar_select %p144, %s145, %s146
    %p150 = pneg %p144
    %p151 = scmp.eq.s32.totalorder %s11, 1
    %p152 = por %p150, %p151
    %p153 = scmp.ne.s32.totalorder %s145, %s148
    %p154 = scmp.eq.s32.totalorder %s11, 0
    %p155 = por %p153, %p154
    %p156 = scmp.ne.s32.totalorder %s145, %s148
    %p157 = scmp.eq.s32.totalorder %s16, 1
    %p158 = por %p156, %p157
    %p159 = scmp.ne.s32.totalorder %s148, %s149
    %p160 = scmp.eq.s32.totalorder %s16, 0
    %p161 = por %p159, %p160
    %p162 = scmp.ne.s32.totalorder %s148, %s149
    %p163 = scmp.eq.s32.totalorder %s17, 1
    %p164 = por %p162, %p163
    %p166 = scmp.ne.s32.totalorder %s149, %s165
    %p167 = scmp.eq.s32.totalorder %s17, 0
    %p168 = por %p166, %p167
    %p169 = scmp.le.s32.totalorder 1, %s11
    %p170 = scmp.lt.s32.totalorder %s11, 3
    %p171 = pnand %p169, %p170
    %p172 = pneg %p171
    // Predicated region
    $region9: #{expandable_classifier_forward.1} parent=5 // pred_check
      _
    $region10: #{expandable_classifier_forward.1} parent=5 // pred_check_branch
      %174 = sbr.rel (%p171) target = $region12
    $region11: #{expandable_classifier_forward.1} parent=5 // pred_region
      %s175 = ssub.s32 %s11, 1
      // Predicated region
      $region13: #{expandable_classifier_forward.1} parent=11 // pred_check
        %p176 = pneg %p72
      $region14: #{expandable_classifier_forward.1} parent=11 // pred_check_branch
        %178 = sbr.rel (%p176) target = $region16
      $region15: #{expandable_classifier_forward.1} parent=11 // pred_region
        _
      $region16: #{expandable_classifier_forward.1} parent=11 // pred_fallthru
        _
      // Predicated region
      $region17: #{expandable_classifier_forward.1} parent=11 // pred_check
        %p179 = pneg %p93
      $region18: #{expandable_classifier_forward.1} parent=11 // pred_check_branch
        %181 = sbr.rel (%p179) target = $region20
      $region19: #{expandable_classifier_forward.1} parent=11 // pred_region
        _
      $region20: #{expandable_classifier_forward.1} parent=11 // pred_fallthru
        _
      // Predicated region
      $region21: #{expandable_classifier_forward.1} parent=11 // pred_check
        %p182 = pneg %p114
      $region22: #{expandable_classifier_forward.1} parent=11 // pred_check_branch
        %184 = sbr.rel (%p182) target = $region24
      $region23: #{expandable_classifier_forward.1} parent=11 // pred_region
        _
      $region24: #{expandable_classifier_forward.1} parent=11 // pred_fallthru
        _
      // Predicated region
      $region25: #{expandable_classifier_forward.1} parent=11 // pred_check
        %p185 = pneg %p135
      $region26: #{expandable_classifier_forward.1} parent=11 // pred_check_branch
        %187 = sbr.rel (%p185) target = $region28
      $region27: #{expandable_classifier_forward.1} parent=11 // pred_region
        _
      $region28: #{expandable_classifier_forward.1} parent=11 // pred_fallthru
        _
    $region12: #{expandable_classifier_forward.1} parent=5 // pred_fallthru
      _
    %p188 = scmp.lt.s32.totalorder %s11, 2
    // Predicated region
    $region29: #{expandable_classifier_forward.1} parent=5 // pred_check
      %p189 = pneg %p188
    $region30: #{expandable_classifier_forward.1} parent=5 // pred_check_branch
      %191 = sbr.rel (%p189) target = $region32
    $region31: #{expandable_classifier_forward.1} parent=5 // pred_region
      // Predicated region
      $region33: #{expandable_classifier_forward.1} parent=31 // pred_check
        %p192 = pneg %p45
      $region34: #{expandable_classifier_forward.1} parent=31 // pred_check_branch
        %194 = sbr.rel (%p192) target = $region36
      $region35: #{expandable_classifier_forward.1} parent=31 // pred_region
        %s195 = smul.u32 32, %s19
        %p196 = scmp.lt.s32.totalorder %s18, 1
        %s197 = scalar_select %p196, %s18, 1
        %p198 = scmp.lt.s32.totalorder %s195, 31
        %s199 = scalar_select %p198, %s195, 31
        %s200 = smul.addr %s197, 32
        %s201 = sadd.s32 %s199, %s200
        %s202 = smul.addr %s201, 4
        %s203 = scalar_lea.vmem %s0, %s202
        %s204 = smul.u32 32, %s19
      $region36: #{expandable_classifier_forward.1} parent=31 // pred_fallthru
        _
    $region32: #{expandable_classifier_forward.1} parent=5 // pred_fallthru
      _
    %p205 = scmp.le.s32.totalorder 1, %s11
    %p206 = scmp.lt.s32.totalorder %s11, 3
    %p207 = pnand %p205, %p206
    %p208 = pneg %p207
    // Predicated region
    $region37: #{expandable_classifier_forward.1} parent=5 // pred_check
      _
    $region38: #{expandable_classifier_forward.1} parent=5 // pred_check_branch
      %210 = sbr.rel (%p207) target = $region40
    $region39: #{expandable_classifier_forward.1} parent=5 // pred_region
      %s211 = ssub.s32 %s11, 1
      %s212 = smul.u32 32, %s21
      %p213 = scmp.lt.s32.totalorder %s20, 1
      %s214 = scalar_select %p213, %s20, 1
      %p215 = scmp.lt.s32.totalorder %s212, 31
      %s216 = scalar_select %p215, %s212, 31
      %s217 = smul.addr %s214, 32
      %s218 = sadd.s32 %s216, %s217
      %s219 = smul.addr %s218, 4
      %s220 = scalar_lea.vmem %s0, %s219
      %p221 = pneg %p51
      %p222 = pneg %p48
      %p223 = pneg %p72
      %p224 = pneg %p69
      %p225 = pneg %p93
      %p226 = pneg %p90
      %p227 = pneg %p114
      %p228 = pneg %p111
      %p229 = pneg %p135
      %p230 = pneg %p132
      %p231 = pneg %p161
      %p232 = pneg %p158
      %p233 = scmp.lt.s32.totalorder %s20, 1
      %s234 = scalar_select %p233, %s20, 1
      %s235 = smul.addr %s234, 8
      %s236 = scalar_lea.vmem %s5, %s235
      %s237 = smul.u32 32, %s21
      %p238 = scmp.lt.s32.totalorder %s20, 1
      %s239 = scalar_select %p238, %s20, 1
      %p240 = scmp.lt.s32.totalorder %s237, 31
      %s241 = scalar_select %p240, %s237, 31
      %s242 = smul.addr %s239, 32
      %s243 = sadd.s32 %s241, %s242
      %s244 = smul.addr %s243, 4
      %s245 = scalar_lea.vmem %s0, %s244
      %s246 = smul.u32 32, %s21
      %p247 = scmp.lt.s32.totalorder %s20, 1
      %s248 = scalar_select %p247, %s20, 1
      %s249 = smul.addr %s248, 8
      %s250 = scalar_lea.vmem %s5, %s249
      %p252 = scmp.eq.s32.totalorder %s21, 0
      // Predicated region
      $region41: #{expandable_classifier_forward.1} parent=39 // pred_check
        %p253 = pneg %p252
      $region42: #{expandable_classifier_forward.1} parent=39 // pred_check_branch
        %255 = sbr.rel (%p253) target = $region44
      $region43: #{expandable_classifier_forward.1} parent=39 // pred_region
        %256 = vst [vmem:[#allocation2] sm:$0x1] 0.0
      $region44: #{expandable_classifier_forward.1} parent=39 // pred_fallthru
        _
      %v257 = vld [vmem:[%s245] sm:$0xf]
      %v258 = vld [vmem:[%s245 + $0x4] sm:$0xf]
      %v259 = vld [vmem:[%s245 + $0x8] sm:$0xf]
      %v260 = vld [vmem:[%s245 + $0xc] sm:$0xf]
      %v261 = vld [vmem:[%s245 + $0x10] sm:$0xf]
      %v262 = vld [vmem:[%s245 + $0x14] sm:$0xf]
      %v263 = vld [vmem:[%s245 + $0x18] sm:$0xf]
      %v264 = vld [vmem:[%s245 + $0x1c] sm:$0xf]
      %v265 = vld [vmem:[%s245 + $0x20] sm:$0xf]
      %v266 = vld [vmem:[%s245 + $0x24] sm:$0xf]
      %v267 = vld [vmem:[%s245 + $0x28] sm:$0xf]
      %v268 = vld [vmem:[%s245 + $0x2c] sm:$0xf]
      %v269 = vld [vmem:[%s245 + $0x30] sm:$0xf]
      %v270 = vld [vmem:[%s245 + $0x34] sm:$0xf]
      %v271 = vld [vmem:[%s245 + $0x38] sm:$0xf]
      %v272 = vld [vmem:[%s245 + $0x3c] sm:$0xf]
      %v273 = vld [vmem:[%s245 + $0x40] sm:$0xf]
      %v274 = vld [vmem:[%s245 + $0x44] sm:$0xf]
      %v275 = vld [vmem:[%s245 + $0x48] sm:$0xf]
      %v276 = vld [vmem:[%s245 + $0x4c] sm:$0xf]
      %v277 = vld [vmem:[%s245 + $0x50] sm:$0xf]
      %v278 = vld [vmem:[%s245 + $0x54] sm:$0xf]
      %v279 = vld [vmem:[%s245 + $0x58] sm:$0xf]
      %v280 = vld [vmem:[%s245 + $0x5c] sm:$0xf]
      %v281 = vld [vmem:[%s245 + $0x60] sm:$0xf]
      %v282 = vld [vmem:[%s245 + $0x64] sm:$0xf]
      %v283 = vld [vmem:[%s245 + $0x68] sm:$0xf]
      %v284 = vld [vmem:[%s245 + $0x6c] sm:$0xf]
      %v285 = vld [vmem:[%s245 + $0x70] sm:$0xf]
      %v286 = vld [vmem:[%s245 + $0x74] sm:$0xf]
      %v287 = vld [vmem:[%s245 + $0x78] sm:$0xf]
      %v288 = vld [vmem:[%s245 + $0x7c] sm:$0xf]
      %v289 = vld [vmem:[%s1] sm:$0xf]
      %v290 = vld [vmem:[%s1 + $0x4] sm:$0xf]
      %v291 = vld [vmem:[%s1 + $0x8] sm:$0xf]
      %v292 = vld [vmem:[%s1 + $0xc] sm:$0xf]
      %v293 = vld [vmem:[%s1 + $0x10] sm:$0xf]
      %v294 = vld [vmem:[%s1 + $0x14] sm:$0xf]
      %v295 = vld [vmem:[%s1 + $0x18] sm:$0xf]
      %v296 = vld [vmem:[%s1 + $0x1c] sm:$0xf]
      %v297 = vld [vmem:[%s1 + $0x20] sm:$0xf]
      %v298 = vld [vmem:[%s1 + $0x24] sm:$0xf]
      %v299 = vld [vmem:[%s1 + $0x28] sm:$0xf]
      %v300 = vld [vmem:[%s1 + $0x2c] sm:$0xf]
      %v301 = vld [vmem:[%s1 + $0x30] sm:$0xf]
      %v302 = vld [vmem:[%s1 + $0x34] sm:$0xf]
      %v303 = vld [vmem:[%s1 + $0x38] sm:$0xf]
      %v304 = vld [vmem:[%s1 + $0x3c] sm:$0xf]
      %v305 = vld [vmem:[%s2] sm:$0x1]
      %v307 = vlaneseq
      %v308 = vshrl.u32 %v307, 7
      %v309 = vsub.s32 0, %v308
      %v310 = vrot.slane %v305, %v309
      %v344 = vunpack.c.l.b16 %v257
      %v345 = vunpack.c.l.b16 %v258
      %v346 = vunpack.c.l.b16 %v259
      %v347 = vunpack.c.l.b16 %v260
      %v348 = vunpack.c.l.b16 %v261
      %v349 = vunpack.c.l.b16 %v262
      %v350 = vunpack.c.l.b16 %v263
      %v351 = vunpack.c.l.b16 %v264
      %v352 = vunpack.c.l.b16 %v265
      %v353 = vunpack.c.l.b16 %v266
      %v354 = vunpack.c.l.b16 %v267
      %v355 = vunpack.c.l.b16 %v268
      %v356 = vunpack.c.l.b16 %v269
      %v357 = vunpack.c.l.b16 %v270
      %v358 = vunpack.c.l.b16 %v271
      %v359 = vunpack.c.l.b16 %v272
      %v360 = vunpack.c.l.b16 %v273
      %v361 = vunpack.c.l.b16 %v274
      %v362 = vunpack.c.l.b16 %v275
      %v363 = vunpack.c.l.b16 %v276
      %v364 = vunpack.c.l.b16 %v277
      %v365 = vunpack.c.l.b16 %v278
      %v366 = vunpack.c.l.b16 %v279
      %v367 = vunpack.c.l.b16 %v280
      %v368 = vunpack.c.l.b16 %v281
      %v369 = vunpack.c.l.b16 %v282
      %v370 = vunpack.c.l.b16 %v283
      %v371 = vunpack.c.l.b16 %v284
      %v372 = vunpack.c.l.b16 %v285
      %v373 = vunpack.c.l.b16 %v286
      %v374 = vunpack.c.l.b16 %v287
      %v375 = vunpack.c.l.b16 %v288
      %v376 = vpack.c.b16 %v345, %v344
      %v377 = vpack.c.b16 %v347, %v346
      %v378 = vpack.c.b16 %v349, %v348
      %v379 = vpack.c.b16 %v351, %v350
      %v380 = vpack.c.b16 %v353, %v352
      %v381 = vpack.c.b16 %v355, %v354
      %v382 = vpack.c.b16 %v357, %v356
      %v383 = vpack.c.b16 %v359, %v358
      %v384 = vpack.c.b16 %v361, %v360
      %v385 = vpack.c.b16 %v363, %v362
      %v386 = vpack.c.b16 %v365, %v364
      %v387 = vpack.c.b16 %v367, %v366
      %v388 = vpack.c.b16 %v369, %v368
      %v389 = vpack.c.b16 %v371, %v370
      %v390 = vpack.c.b16 %v373, %v372
      %v391 = vpack.c.b16 %v375, %v374
      %v424 = vunpack.c.l.b16 %v289
      %v425 = vunpack.c.l.b16 %v290
      %v426 = vunpack.c.l.b16 %v291
      %v427 = vunpack.c.l.b16 %v292
      %v428 = vunpack.c.l.b16 %v293
      %v429 = vunpack.c.l.b16 %v294
      %v430 = vunpack.c.l.b16 %v295
      %v431 = vunpack.c.l.b16 %v296
      %v432 = vunpack.c.l.b16 %v297
      %v433 = vunpack.c.l.b16 %v298
      %v434 = vunpack.c.l.b16 %v299
      %v435 = vunpack.c.l.b16 %v300
      %v436 = vunpack.c.l.b16 %v301
      %v437 = vunpack.c.l.b16 %v302
      %v438 = vunpack.c.l.b16 %v303
      %v439 = vunpack.c.l.b16 %v304
      %v440 = vpack.c.b16 %v425, %v424
      %v441 = vpack.c.b16 %v427, %v426
      %v442 = vpack.c.b16 %v429, %v428
      %v443 = vpack.c.b16 %v431, %v430
      %v444 = vpack.c.b16 %v433, %v432
      %v445 = vpack.c.b16 %v435, %v434
      %v446 = vpack.c.b16 %v437, %v436
      %v447 = vpack.c.b16 %v439, %v438
      %456 = vmatprep.subr.bf16.mxu0 0
      %457 = vmatpush1.bf16.msra.mxu0 %v440
      %458 = vmatprep.subr.bf16.mxu0 0
      %459 = vmatpush1.bf16.msra.mxu0 %v441
      %460 = vmatprep.subr.bf16.mxu0 0
      %461 = vmatpush1.bf16.msra.mxu0 %v442
      %462 = vmatprep.subr.bf16.mxu0 0
      %463 = vmatpush1.bf16.msra.mxu0 %v443
      %464 = vmatprep.subr.bf16.mxu0 0
      %465 = vmatpush1.bf16.msra.mxu0 %v444
      %466 = vmatprep.subr.bf16.mxu0 0
      %467 = vmatpush1.bf16.msra.mxu0 %v445
      %468 = vmatprep.subr.bf16.mxu0 0
      %469 = vmatpush1.bf16.msra.mxu0 %v446
      %470 = vmatprep.subr.bf16.mxu0 0
      %471 = vmatpush1.bf16.msra.mxu0 %v447
      %472 = vmatprep.subr.bf16.mxu0 0
      %473 = vmatpush1.bf16.msra.mxu0 0
      %474 = vmatprep.subr.bf16.mxu0 0
      %475 = vmatpush1.bf16.msra.mxu0 0
      %476 = vmatprep.subr.bf16.mxu0 0
      %477 = vmatpush1.bf16.msra.mxu0 0
      %478 = vmatprep.subr.bf16.mxu0 0
      %479 = vmatpush1.bf16.msra.mxu0 0
      %480 = vmatprep.subr.bf16.mxu0 0
      %481 = vmatpush1.bf16.msra.mxu0 0
      %482 = vmatprep.subr.bf16.mxu0 0
      %483 = vmatpush1.bf16.msra.mxu0 0
      %484 = vmatprep.subr.bf16.mxu0 0
      %485 = vmatpush1.bf16.msra.mxu0 0
      %486 = vmatprep.subr.bf16.mxu0 0
      %487 = vmatpush1.bf16.msra.mxu0 0
      %488 = vmatprep.mubr.bf16.mxu0 0
      %489 = vmatmul.mubr.bf16.gmra.mrb[0].mxu0 %v376
      %v490 = vpop.f32.mrb[0].mxu0
      %v491 = vadd.f32 %v310, %v490
      %v492 = vpop.f32.mrb[0].mxu0
      %v493 = vpop.f32.mrb[0].mxu0
      %v494 = vadd.f32 %v310, %v493
      %v495 = vpop.f32.mrb[0].mxu0
      %496 = vmatprep.mubr.bf16.mxu0 0
      %497 = vmatmul.mubr.bf16.gmra.mrb[0].mxu0 %v377
      %v498 = vpop.f32.mrb[0].mxu0
      %v499 = vadd.f32 %v310, %v498
      %v500 = vpop.f32.mrb[0].mxu0
      %v501 = vpop.f32.mrb[0].mxu0
      %v502 = vadd.f32 %v310, %v501
      %v503 = vpop.f32.mrb[0].mxu0
      %504 = vmatprep.mubr.bf16.mxu0 0
      %505 = vmatmul.mubr.bf16.gmra.mrb[0].mxu0 %v378
      %v506 = vpop.f32.mrb[0].mxu0
      %v507 = vadd.f32 %v310, %v506
      %v508 = vpop.f32.mrb[0].mxu0
      %v509 = vpop.f32.mrb[0].mxu0
      %v510 = vadd.f32 %v310, %v509
      %v511 = vpop.f32.mrb[0].mxu0
      %512 = vmatprep.mubr.bf16.mxu0 0
      %513 = vmatmul.mubr.bf16.gmra.mrb[0].mxu0 %v379
      %v514 = vpop.f32.mrb[0].mxu0
      %v515 = vadd.f32 %v310, %v514
      %v516 = vpop.f32.mrb[0].mxu0
      %v517 = vpop.f32.mrb[0].mxu0
      %v518 = vadd.f32 %v310, %v517
      %v519 = vpop.f32.mrb[0].mxu0
      %520 = vmatprep.mubr.bf16.mxu0 0
      %521 = vmatmul.mubr.bf16.gmra.mrb[0].mxu0 %v380
      %v522 = vpop.f32.mrb[0].mxu0
      %v523 = vadd.f32 %v310, %v522
      %v524 = vpop.f32.mrb[0].mxu0
      %v525 = vpop.f32.mrb[0].mxu0
      %v526 = vadd.f32 %v310, %v525
      %v527 = vpop.f32.mrb[0].mxu0
      %528 = vmatprep.mubr.bf16.mxu0 0
      %529 = vmatmul.mubr.bf16.gmra.mrb[0].mxu0 %v381
      %v530 = vpop.f32.mrb[0].mxu0
      %v531 = vadd.f32 %v310, %v530
      %v532 = vpop.f32.mrb[0].mxu0
      %v533 = vpop.f32.mrb[0].mxu0
      %v534 = vadd.f32 %v310, %v533
      %v535 = vpop.f32.mrb[0].mxu0
      %536 = vmatprep.mubr.bf16.mxu0 0
      %537 = vmatmul.mubr.bf16.gmra.mrb[0].mxu0 %v382
      %v538 = vpop.f32.mrb[0].mxu0
      %v539 = vadd.f32 %v310, %v538
      %v540 = vpop.f32.mrb[0].mxu0
      %v541 = vpop.f32.mrb[0].mxu0
      %v542 = vadd.f32 %v310, %v541
      %v543 = vpop.f32.mrb[0].mxu0
      %544 = vmatprep.mubr.bf16.mxu0 0
      %545 = vmatmul.mubr.bf16.gmra.mrb[0].mxu0 %v383
      %v546 = vpop.f32.mrb[0].mxu0
      %v547 = vadd.f32 %v310, %v546
      %v548 = vpop.f32.mrb[0].mxu0
      %v549 = vpop.f32.mrb[0].mxu0
      %v550 = vadd.f32 %v310, %v549
      %v551 = vpop.f32.mrb[0].mxu0
      %552 = vmatprep.mubr.bf16.mxu0 0
      %553 = vmatmul.mubr.bf16.gmra.mrb[0].mxu0 %v384
      %v554 = vpop.f32.mrb[0].mxu0
      %v555 = vadd.f32 %v310, %v554
      %v556 = vpop.f32.mrb[0].mxu0
      %v557 = vpop.f32.mrb[0].mxu0
      %v558 = vadd.f32 %v310, %v557
      %v559 = vpop.f32.mrb[0].mxu0
      %560 = vmatprep.mubr.bf16.mxu0 0
      %561 = vmatmul.mubr.bf16.gmra.mrb[0].mxu0 %v385
      %v562 = vpop.f32.mrb[0].mxu0
      %v563 = vadd.f32 %v310, %v562
      %v564 = vpop.f32.mrb[0].mxu0
      %v565 = vpop.f32.mrb[0].mxu0
      %v566 = vadd.f32 %v310, %v565
      %v567 = vpop.f32.mrb[0].mxu0
      %568 = vmatprep.mubr.bf16.mxu0 0
      %569 = vmatmul.mubr.bf16.gmra.mrb[0].mxu0 %v386
      %v570 = vpop.f32.mrb[0].mxu0
      %v571 = vadd.f32 %v310, %v570
      %v572 = vpop.f32.mrb[0].mxu0
      %v573 = vpop.f32.mrb[0].mxu0
      %v574 = vadd.f32 %v310, %v573
      %v575 = vpop.f32.mrb[0].mxu0
      %576 = vmatprep.mubr.bf16.mxu0 0
      %577 = vmatmul.mubr.bf16.gmra.mrb[0].mxu0 %v387
      %v578 = vpop.f32.mrb[0].mxu0
      %v579 = vadd.f32 %v310, %v578
      %v580 = vpop.f32.mrb[0].mxu0
      %v581 = vpop.f32.mrb[0].mxu0
      %v582 = vadd.f32 %v310, %v581
      %v583 = vpop.f32.mrb[0].mxu0
      %584 = vmatprep.mubr.bf16.mxu0 0
      %585 = vmatmul.mubr.bf16.gmra.mrb[0].mxu0 %v388
      %v586 = vpop.f32.mrb[0].mxu0
      %v587 = vadd.f32 %v310, %v586
      %v588 = vpop.f32.mrb[0].mxu0
      %v589 = vpop.f32.mrb[0].mxu0
      %v590 = vadd.f32 %v310, %v589
      %v591 = vpop.f32.mrb[0].mxu0
      %592 = vmatprep.mubr.bf16.mxu0 0
      %593 = vmatmul.mubr.bf16.gmra.mrb[0].mxu0 %v389
      %v594 = vpop.f32.mrb[0].mxu0
      %v595 = vadd.f32 %v310, %v594
      %v596 = vpop.f32.mrb[0].mxu0
      %v597 = vpop.f32.mrb[0].mxu0
      %v598 = vadd.f32 %v310, %v597
      %v599 = vpop.f32.mrb[0].mxu0
      %600 = vmatprep.mubr.bf16.mxu0 0
      %601 = vmatmul.mubr.bf16.gmra.mrb[0].mxu0 %v390
      %v602 = vpop.f32.mrb[0].mxu0
      %v603 = vadd.f32 %v310, %v602
      %v604 = vpop.f32.mrb[0].mxu0
      %v605 = vpop.f32.mrb[0].mxu0
      %v606 = vadd.f32 %v310, %v605
      %v607 = vpop.f32.mrb[0].mxu0
      %608 = vmatprep.mubr.bf16.mxu0 0
      %609 = vmatmul.mubr.bf16.gmra.mrb[0].mxu0 %v391
      %v610 = vpop.f32.mrb[0].mxu0
      %v611 = vadd.f32 %v310, %v610
      %v612 = vpop.f32.mrb[0].mxu0
      %v613 = vpop.f32.mrb[0].mxu0
      %v614 = vadd.f32 %v310, %v613
      %v615 = vpop.f32.mrb[0].mxu0
      %616 = vdwg.mxu0
      %v617 = vmax.f32 %v491, 0.0
      %v618 = vmax.f32 %v494, 0.0
      %v619 = vmax.f32 %v499, 0.0
      %v620 = vmax.f32 %v502, 0.0
      %v621 = vmax.f32 %v507, 0.0
      %v622 = vmax.f32 %v510, 0.0
      %v623 = vmax.f32 %v515, 0.0
      %v624 = vmax.f32 %v518, 0.0
      %v625 = vmax.f32 %v523, 0.0
      %v626 = vmax.f32 %v526, 0.0
      %v627 = vmax.f32 %v531, 0.0
      %v628 = vmax.f32 %v534, 0.0
      %v629 = vmax.f32 %v539, 0.0
      %v630 = vmax.f32 %v542, 0.0
      %v631 = vmax.f32 %v547, 0.0
      %v632 = vmax.f32 %v550, 0.0
      %v633 = vmax.f32 %v555, 0.0
      %v634 = vmax.f32 %v558, 0.0
      %v635 = vmax.f32 %v563, 0.0
      %v636 = vmax.f32 %v566, 0.0
      %v637 = vmax.f32 %v571, 0.0
      %v638 = vmax.f32 %v574, 0.0
      %v639 = vmax.f32 %v579, 0.0
      %v640 = vmax.f32 %v582, 0.0
      %v641 = vmax.f32 %v587, 0.0
      %v642 = vmax.f32 %v590, 0.0
      %v643 = vmax.f32 %v595, 0.0
      %v644 = vmax.f32 %v598, 0.0
      %v645 = vmax.f32 %v603, 0.0
      %v646 = vmax.f32 %v606, 0.0
      %v647 = vmax.f32 %v611, 0.0
      %v648 = vmax.f32 %v614, 0.0
      %v649 = vld [vmem:[#allocation2] sm:$0x1]
      %v650 = vadd.f32 %v617, %v618
      %v651 = vadd.f32 %v650, %v619
      %v652 = vadd.f32 %v651, %v620
      %v653 = vadd.f32 %v652, %v621
      %v654 = vadd.f32 %v653, %v622
      %v655 = vadd.f32 %v654, %v623
      %v656 = vadd.f32 %v655, %v624
      %v657 = vadd.f32 %v656, %v625
      %v658 = vadd.f32 %v657, %v626
      %v659 = vadd.f32 %v658, %v627
      %v660 = vadd.f32 %v659, %v628
      %v661 = vadd.f32 %v660, %v629
      %v662 = vadd.f32 %v661, %v630
      %v663 = vadd.f32 %v662, %v631
      %v664 = vadd.f32 %v663, %v632
      %v665 = vadd.f32 %v664, %v633
      %v666 = vadd.f32 %v665, %v634
      %v667 = vadd.f32 %v666, %v635
      %v668 = vadd.f32 %v667, %v636
      %v669 = vadd.f32 %v668, %v637
      %v670 = vadd.f32 %v669, %v638
      %v671 = vadd.f32 %v670, %v639
      %v672 = vadd.f32 %v671, %v640
      %v673 = vadd.f32 %v672, %v641
      %v674 = vadd.f32 %v673, %v642
      %v675 = vadd.f32 %v674, %v643
      %v676 = vadd.f32 %v675, %v644
      %v677 = vadd.f32 %v676, %v645
      %v678 = vadd.f32 %v677, %v646
      %v679 = vadd.f32 %v678, %v647
      %v680 = vadd.f32 %v679, %v648
      %v681 = vrot.slane %v680, 4
      %v682 = vadd.f32 %v680, %v681
      %v683 = vrot.slane %v682, 2
      %v684 = vadd.f32 %v682, %v683
      %v685 = vrot.slane %v684, 1
      %v686 = vadd.f32 %v684, %v685
      %v687 = vadd.f32 %v649, %v686
      %688 = vst [vmem:[#allocation2] sm:$0x1] %v687
      // Predicated region
      $region45: #{expandable_classifier_forward.1} parent=39 // pred_check
        %p689 = pneg %p252
      $region46: #{expandable_classifier_forward.1} parent=39 // pred_check_branch
        %691 = sbr.rel (%p689) target = $region48
      $region47: #{expandable_classifier_forward.1} parent=39 // pred_region
        %v692 = vld [vmem:[#allocation2] sm:$0x1]
        %v693 = vmul.f32 %v692, 0.00390625
        %v694 = vld [vmem:[%s3] sm:$0xff]
        %v695 = vld [vmem:[%s3 + $0x8] sm:$0xff]
        %v696 = vld [vmem:[%s3 + $0x10] sm:$0xff]
        %v697 = vld [vmem:[%s3 + $0x18] sm:$0xff]
        %v698 = vld [vmem:[%s3 + $0x20] sm:$0xff]
        %v699 = vld [vmem:[%s3 + $0x28] sm:$0xff]
        %v700 = vld [vmem:[%s3 + $0x30] sm:$0xff]
        %v701 = vld [vmem:[%s3 + $0x38] sm:$0xff]
        %v702 = vld [vmem:[%s3 + $0x40] sm:$0xff]
        %v703 = vld [vmem:[%s3 + $0x48] sm:$0xff]
        %v704 = vld [vmem:[%s3 + $0x50] sm:$0xff]
        %v705 = vld [vmem:[%s3 + $0x58] sm:$0xff]
        %v706 = vld [vmem:[%s3 + $0x60] sm:$0xff]
        %v707 = vld [vmem:[%s3 + $0x68] sm:$0xff]
        %v708 = vld [vmem:[%s3 + $0x70] sm:$0xff]
        %v709 = vld [vmem:[%s3 + $0x78] sm:$0xff]
        %v710 = vld [vmem:[%s4] sm:$0x1]
        %711 = vmatprep.subr.mxu0 0.0
        %712 = vmatpush1.msra.mxu0 %v694
        %713 = vmatprep.subr.mxu0 0.0
        %714 = vmatpush1.msra.mxu0 %v695
        %715 = vmatprep.subr.mxu0 0.0
        %716 = vmatpush1.msra.mxu0 %v696
        %717 = vmatprep.subr.mxu0 0.0
        %718 = vmatpush1.msra.mxu0 %v697
        %719 = vmatprep.subr.mxu0 0.0
        %720 = vmatpush1.msra.mxu0 %v698
        %721 = vmatprep.subr.mxu0 0.0
        %722 = vmatpush1.msra.mxu0 %v699
        %723 = vmatprep.subr.mxu0 0.0
        %724 = vmatpush1.msra.mxu0 %v700
        %725 = vmatprep.subr.mxu0 0.0
        %726 = vmatpush1.msra.mxu0 %v701
        %727 = vmatprep.subr.mxu0 0.0
        %728 = vmatpush1.msra.mxu0 %v702
        %729 = vmatprep.subr.mxu0 0.0
        %730 = vmatpush1.msra.mxu0 %v703
        %731 = vmatprep.subr.mxu0 0.0
        %732 = vmatpush1.msra.mxu0 %v704
        %733 = vmatprep.subr.mxu0 0.0
        %734 = vmatpush1.msra.mxu0 %v705
        %735 = vmatprep.subr.mxu0 0.0
        %736 = vmatpush1.msra.mxu0 %v706
        %737 = vmatprep.subr.mxu0 0.0
        %738 = vmatpush1.msra.mxu0 %v707
        %739 = vmatprep.subr.mxu0 0.0
        %740 = vmatpush1.msra.mxu0 %v708
        %741 = vmatprep.subr.mxu0 0.0
        %742 = vmatpush1.msra.mxu0 %v709
        %743 = vmatprep.subr.mxu0 0.0
        %744 = vmatpush1.msra.mxu0 0.0
        %745 = vmatprep.subr.mxu0 0.0
        %746 = vmatpush1.msra.mxu0 0.0
        %747 = vmatprep.subr.mxu0 0.0
        %748 = vmatpush1.msra.mxu0 0.0
        %749 = vmatprep.subr.mxu0 0.0
        %750 = vmatpush1.msra.mxu0 0.0
        %751 = vmatprep.subr.mxu0 0.0
        %752 = vmatpush1.msra.mxu0 0.0
        %753 = vmatprep.subr.mxu0 0.0
        %754 = vmatpush1.msra.mxu0 0.0
        %755 = vmatprep.subr.mxu0 0.0
        %756 = vmatpush1.msra.mxu0 0.0
        %757 = vmatprep.subr.mxu0 0.0
        %758 = vmatpush1.msra.mxu0 0.0
        %759 = vmatprep.subr.mxu0 0.0
        %760 = vmatpush1.msra.mxu0 0.0
        %761 = vmatprep.subr.mxu0 0.0
        %762 = vmatpush1.msra.mxu0 0.0
        %763 = vmatprep.subr.mxu0 0.0
        %764 = vmatpush1.msra.mxu0 0.0
        %765 = vmatprep.subr.mxu0 0.0
        %766 = vmatpush1.msra.mxu0 0.0
        %767 = vmatprep.subr.mxu0 0.0
        %768 = vmatpush1.msra.mxu0 0.0
        %769 = vmatprep.subr.mxu0 0.0
        %770 = vmatpush1.msra.mxu0 0.0
        %771 = vmatprep.subr.mxu0 0.0
        %772 = vmatpush1.msra.mxu0 0.0
        %773 = vmatprep.subr.mxu0 0.0
        %774 = vmatpush1.msra.mxu0 0.0
        %775 = vmatprep.mubr.f32.mxu0 0.0
        %776 = vmatmul.mubr.f32.gmra.mrb[0].mxu0 %v693
        %v777 = vpop.f32.mrb[0].mxu0
        %v778 = vadd.f32 %v710, %v777
        %v779 = vpop.f32.mrb[0].mxu0
        %780 = vdwg.mxu0
        %v781 = vlaneseq
        %v782 = vshrl.u32 %v781, 7
        %v783 = vsub.s32 0, %v782
        %v784 = vrot.slane %v778, %v783
        %785 = vst [vmem:[%s250] sm:$0xff] %v784
      $region48: #{expandable_classifier_forward.1} parent=39 // pred_fallthru
        _
      %p786 = scmp.lt.s32.totalorder %s20, 1
      %s787 = scalar_select %p786, %s20, 1
      %s788 = smul.addr %s787, 8
      %s789 = scalar_lea.vmem %s5, %s788
      // Predicated region
      $region49: #{expandable_classifier_forward.1} parent=39 // pred_check
        %p790 = pneg %p158
      $region50: #{expandable_classifier_forward.1} parent=39 // pred_check_branch
        %792 = sbr.rel (%p790) target = $region52
      $region51: #{expandable_classifier_forward.1} parent=39 // pred_region
        _
      $region52: #{expandable_classifier_forward.1} parent=39 // pred_fallthru
        _
    $region40: #{expandable_classifier_forward.1} parent=5 // pred_fallthru
      _
    %p793 = scmp.le.s32.totalorder 2, %s11
    // Predicated region
    $region53: #{expandable_classifier_forward.1} parent=5 // pred_check
      %p794 = pneg %p793
    $region54: #{expandable_classifier_forward.1} parent=5 // pred_check_branch
      %796 = sbr.rel (%p794) target = $region56
    $region55: #{expandable_classifier_forward.1} parent=5 // pred_region
      %s797 = ssub.s32 %s11, 2
      // Predicated region
      $region57: #{expandable_classifier_forward.1} parent=55 // pred_check
        %p798 = pneg %p164
      $region58: #{expandable_classifier_forward.1} parent=55 // pred_check_branch
        %800 = sbr.rel (%p798) target = $region60
      $region59: #{expandable_classifier_forward.1} parent=55 // pred_region
        %p801 = scmp.lt.s32.totalorder %s22, 1
        %s802 = scalar_select %p801, %s22, 1
        %s803 = smul.addr %s802, 8
        %s804 = scalar_lea.vmem %s5, %s803
      $region60: #{expandable_classifier_forward.1} parent=55 // pred_fallthru
        _
    $region56: #{expandable_classifier_forward.1} parent=5 // pred_fallthru
      _
  $region6: #{expandable_classifier_forward.1} parent=0 // loop_footer
    %s15 = sadd.s32 1, %s11
  $region7: #{expandable_classifier_forward.1} parent=0 // loop_footer_branch
    %10 = sbr.rel target = $region3
  $region8: #{expandable_classifier_forward.1} parent=0 // loop_exit
    _

</llo_original>
